<compile_context>
chip_gen: v7x
topology: tpu7x:2x2x1
jax: 0.10.0
libtpu: 0.0.40
codegen_flags: <defaults>
</compile_context>

<pallas_src>
import functools

import jax
import jax.numpy as jnp
import numpy as np
from jax.experimental import pallas as pl
from jax.experimental.pallas import tpu as pltpu


def _fused_p_losses_kernel(coef_a_ref, coef_s_ref, x_ref, n_ref, tb_ref, w_ref,
                           out_ref, *, BB, H, WC):
    g = pl.program_id(0)
    M = BB * H

    # ---- q_sample: per packed image, scalar coefs (SMEM) * lane-dense tiles ----
    xn_rows = []
    for bb in range(BB):
        a = coef_a_ref[g * BB + bb]          # sqrt_alphas_cumprod[t_b]
        s = coef_s_ref[g * BB + bb]          # sqrt_one_minus_alphas_cumprod[t_b]
        xn_rows.append(a * x_ref[bb] + s * n_ref[bb])          # (H, WC) f32, VPU
    xn = xn_rows[0] if BB == 1 else jnp.concatenate(xn_rows, axis=0)   # (M, WC)
    xnb = xn.astype(jnp.bfloat16)            # single bf16 cast of the activations

    # ---- dy taps without halo copies / unaligned sublane slices --------------
    # Row shift by +-1 within each packed image via tiny 0/1 shift matrices on
    # the MXU (boundary rows of every image are zeroed by construction, which
    # also handles the BB-packing batch boundaries).  No relayout, no masks on
    # the activations, XLU/VPU stay free.
    ri = jax.lax.broadcasted_iota(jnp.int32, (M, M), 0)
    ci = jax.lax.broadcasted_iota(jnp.int32, (M, M), 1)
    prev_sel = (ci + 1 == ri)                # row i reads row i-1
    next_sel = (ci == ri + 1)                # row i reads row i+1
    for bb in range(BB):
        prev_sel = prev_sel & (ri != bb * H)             # first row of image bb
        next_sel = next_sel & (ri != bb * H + H - 1)     # last  row of image bb
    s_prev = jnp.where(prev_sel, 1.0, 0.0).astype(jnp.bfloat16)
    s_next = jnp.where(next_sel, 1.0, 0.0).astype(jnp.bfloat16)
    prev = jnp.dot(s_prev, xnb, preferred_element_type=jnp.float32).astype(jnp.bfloat16)
    nxt = jnp.dot(s_next, xnb, preferred_element_type=jnp.float32).astype(jnp.bfloat16)

    # ---- synthetic denoise_fn: one lane-dense K=3*WC MXU matmul ---------------
    # The dx taps live in the block-tridiagonal folded weight (built once in the
    # wrapper); the dy taps are the lane-concatenated [prev, xn, next] LHS.
    lhs = jnp.concatenate([prev, xnb, nxt], axis=1)      # (M, 3*WC) bf16, aligned
    conv = jnp.dot(lhs, w_ref[...], preferred_element_type=jnp.float32)   # (M, WC)

    # ---- bias + time embedding, squared error, 8-row folded partial sums -----
    # Per-stripe fold keeps vreg pressure bounded and the store is one full
    # unmasked (8, WC) tile per grid step (no cross-lane reduce in-kernel).
    part = jnp.zeros((8, WC), dtype=jnp.float32)
    for bb in range(BB):
        pred = conv[bb * H:(bb + 1) * H, :] + tb_ref[bb]   # (H, WC) + (1, WC)
        d = pred - n_ref[bb]
        d2 = d * d
        for r in range(0, H, 8):
            part = part + d2[r:r + 8, :]
    out_ref[0] = part


def _pick_block_batch(B, H, target_rows=256):
    """Pack BB images per grid step so matmul M ~ MXU height, preferring >=2 steps."""
    cap = max(1, target_rows // H)
    divisors = [bb for bb in range(1, B + 1) if B % bb == 0 and bb <= cap]
    multi_step = [bb for bb in divisors if B // bb >= 2]
    return max(multi_step) if multi_step else max(divisors)


def fold_conv3x3_weights(w_hwio, W):
    """Fold the 3x3 conv's dx/channel taps into one (3*W*C, W*C) bf16 matmul weight.

    Depends only on the conv weights -> compute ONCE and reuse every call
    (hoisted out of the per-step path per perf review).
    Row block kh*W*C.. holds the block-tridiagonal fold of w_hwio[kh] over W:
      M_kh[wi*C+ci, wo*C+co] = w[kh, kw, ci, co]  with  wi = wo + kw - 1
    (out-of-range blocks absent == SAME zero padding along W).
    """
    KH, KW, C, Co = w_hwio.shape
    assert (KH, KW) == (3, 3) and C == Co
    mats = []
    for kh in range(3):
        m = sum(jnp.kron(jnp.eye(W, k=1 - kw, dtype=jnp.float32),
                         w_hwio[kh, kw].astype(jnp.float32)) for kw in range(3))
        mats.append(m)
    return jnp.concatenate(mats, axis=0).astype(jnp.bfloat16)       # (3*W*C, W*C)


@jax.jit
def gaussian_diffusion_p_losses(x_nhwc, t, noise_nhwc, sqrt_ac, sqrt_1mac,
                                w_cat, bias, temb):
    """loss = mean((denoise_fn(q_sample(x, t, noise), t) - noise)^2).

    Activations are NHWC (channels-last) so the kernel sees a lane-dense
    (B, H, W*C) layout with no per-call transpose.
    """
    B, H, W, C = x_nhwc.shape
    WC = W * C
    assert H % 8 == 0, "H must be a multiple of 8 (sublane-folded partials)"
    assert WC % 128 == 0, "W*C must be lane-dense"   # TODO(synk): generalize W*C

    x = x_nhwc.reshape(B, H, WC).astype(jnp.float32)
    noise = noise_nhwc.reshape(B, H, WC).astype(jnp.float32)

    coef_a = sqrt_ac[t].astype(jnp.float32)                          # (B,)
    coef_s = sqrt_1mac[t].astype(jnp.float32)                        # (B,)

    # Per-batch (bias + time embedding), tiled across W on the lane axis.
    tb = jnp.tile(temb[t] + bias[None, :], (1, W)).reshape(B, 1, WC).astype(jnp.float32)

    BB = _pick_block_batch(B, H)
    G = B // BB

    kernel = functools.partial(_fused_p_losses_kernel, BB=BB, H=H, WC=WC)

    partials = pl.pallas_call(
        kernel,
        out_shape=jax.ShapeDtypeStruct((G, 8, WC), jnp.float32),
        grid=(G,),
        in_specs=[
            pl.BlockSpec(memory_space=pltpu.MemorySpace.SMEM),       # coef_a (B,)
            pl.BlockSpec(memory_space=pltpu.MemorySpace.SMEM),       # coef_s (B,)
            pl.BlockSpec((BB, H, WC), lambda g: (g, 0, 0)),          # x
            pl.BlockSpec((BB, H, WC), lambda g: (g, 0, 0)),          # noise
            pl.BlockSpec((BB, 1, WC), lambda g: (g, 0, 0)),          # temb[t]+bias
            pl.BlockSpec((3 * WC, WC), lambda g: (0, 0)),            # folded conv W
        ],
        out_specs=pl.BlockSpec((1, 8, WC), lambda g: (g, 0, 0)),     # per-step partial
        compiler_params=pltpu.CompilerParams(
            dimension_semantics=("parallel",)),       # disjoint outputs -> race-free
    )(coef_a, coef_s, x, noise, tb, w_cat)

    return jnp.sum(partials) / (B * C * H * W)


def reference_loss(x_nhwc, t, noise_nhwc, sqrt_ac, sqrt_1mac, w_hwio, bias, temb):
    """Pure-JAX reference of the same forward pass."""
    a = sqrt_ac[t][:, None, None, None]
    s = sqrt_1mac[t][:, None, None, None]
    xn = a * x_nhwc + s * noise_nhwc
    pred = jax.lax.conv_general_dilated(
        xn, w_hwio, window_strides=(1, 1), padding='SAME',
        dimension_numbers=('NHWC', 'HWIO', 'NHWC'))
    pred = pred + bias[None, None, None, :] + temb[t][:, None, None, :]
    return jnp.mean((pred - noise_nhwc) ** 2)


if __name__ == "__main__":
    B, C, H, W, T = 4, 8, 16, 16, 50

    key = jax.random.PRNGKey(0)
    k1, k2, k3, k4, k5, k6 = jax.random.split(key, 6)

    # PyTorch-convention NCHW inputs.
    x_nchw = jax.random.normal(k1, (B, C, H, W), dtype=jnp.float32)
    noise_nchw = jax.random.normal(k2, (B, C, H, W), dtype=jnp.float32)   # randn_like
    t = jax.random.randint(k3, (B,), 0, T)                                # per-batch step

    # Deterministic diffusion schedule buffers (registered in __init__).
    betas = jnp.linspace(1e-4, 2e-2, T, dtype=jnp.float32)
    alphas_cumprod = jnp.cumprod(1.0 - betas)
    sqrt_ac = jnp.sqrt(alphas_cumprod)
    sqrt_1mac = jnp.sqrt(1.0 - alphas_cumprod)

    # Deterministic synthetic denoise_fn parameters.
    # TODO(synk): denoise_fn is an arbitrary injected nn.Module in the original
    # code; here it is a fixed conv3x3 + bias + time-embedding stand-in.
    w_hwio = 0.1 * jax.random.normal(k4, (3, 3, C, C), dtype=jnp.float32)
    bias = 0.05 * jax.random.normal(k6, (C,), dtype=jnp.float32)
    temb = 0.1 * jax.random.normal(k5, (T, C), dtype=jnp.float32)

    # One-time prep, hoisted out of the per-call path (perf review):
    # channels-last activations + folded conv weight (cache across training steps).
    x_nhwc = jnp.transpose(x_nchw, (0, 2, 3, 1))
    noise_nhwc = jnp.transpose(noise_nchw, (0, 2, 3, 1))
    w_cat = fold_conv3x3_weights(w_hwio, W)

    loss = gaussian_diffusion_p_losses(x_nhwc, t, noise_nhwc, sqrt_ac, sqrt_1mac,
                                       w_cat, bias, temb)
    loss = jax.block_until_ready(loss)

    ref = reference_loss(x_nhwc, t, noise_nhwc, sqrt_ac, sqrt_1mac, w_hwio, bias, temb)
    ref = jax.block_until_ready(ref)

    assert np.isfinite(float(loss))
    assert np.allclose(float(loss), float(ref), rtol=1e-2, atol=1e-4), (
        float(loss), float(ref))
    print("KERNEL_OK")
</pallas_src>

<mosaic_0001>
module attributes {stable_mosaic.version = 11 : i64} {
  func.func @_fused_p_losses_kernel(%arg0: i32, %arg1: memref<4xf32, #tpu.memory_space<smem>>, %arg2: memref<4xf32, #tpu.memory_space<smem>>, %arg3: memref<2x16x128xf32, #tpu.memory_space<vmem>>, %arg4: memref<2x16x128xf32, #tpu.memory_space<vmem>>, %arg5: memref<2x1x128xf32, #tpu.memory_space<vmem>>, %arg6: memref<384x128xbf16, #tpu.memory_space<vmem>>, %arg7: memref<1x8x128xf32, #tpu.memory_space<vmem>>) attributes {dimension_semantics = [#tpu.dimension_semantics<parallel>], iteration_bounds = array<i64: 2>, scalar_prefetch = 0 : i64, scratch_operands = 0 : i64, tpu.core_type = #tpu.core_type<tc>, window_params = [{transform_indices = @transform_0, window_bounds = array<i64: 4>}, {transform_indices = @transform_1, window_bounds = array<i64: 4>}, {transform_indices = @transform_2, window_bounds = array<i64: 2, 16, 128>}, {transform_indices = @transform_3, window_bounds = array<i64: 2, 16, 128>}, {transform_indices = @transform_4, window_bounds = array<i64: 2, 1, 128>}, {pipeline_mode = #tpu.pipeline_mode<synchronous>, transform_indices = @transform_5, window_bounds = array<i64: 384, 128>}, {transform_indices = @transform_6, window_bounds = array<i64: 1, 8, 128>}]} {
    %c2_i32 = arith.constant 2 : i32
    %0 = arith.muli %arg0, %c2_i32 : i32
    %c0_i32 = arith.constant 0 : i32
    %1 = arith.addi %0, %c0_i32 : i32
    %2 = arith.index_cast %1 : i32 to index
    %3 = memref.load %arg1[%2] : memref<4xf32, #tpu.memory_space<smem>>
    %c2_i32_0 = arith.constant 2 : i32
    %4 = arith.muli %arg0, %c2_i32_0 : i32
    %c0_i32_1 = arith.constant 0 : i32
    %5 = arith.addi %4, %c0_i32_1 : i32
    %6 = arith.index_cast %5 : i32 to index
    %7 = memref.load %arg2[%6] : memref<4xf32, #tpu.memory_space<smem>>
    %c0 = arith.constant 0 : index
    %c0_2 = arith.constant 0 : index
    %c0_3 = arith.constant 0 : index
    %8 = vector.load %arg3[%c0, %c0_2, %c0_3] : memref<2x16x128xf32, #tpu.memory_space<vmem>>, vector<1x16x128xf32>
    %9 = vector.shape_cast %8 : vector<1x16x128xf32> to vector<16x128xf32>
    %10 = vector.broadcast %3 : f32 to vector<16x128xf32>
    %11 = arith.mulf %10, %9 : vector<16x128xf32>
    %c0_4 = arith.constant 0 : index
    %c0_5 = arith.constant 0 : index
    %c0_6 = arith.constant 0 : index
    %12 = vector.load %arg4[%c0_4, %c0_5, %c0_6] : memref<2x16x128xf32, #tpu.memory_space<vmem>>, vector<1x16x128xf32>
    %13 = vector.shape_cast %12 : vector<1x16x128xf32> to vector<16x128xf32>
    %14 = vector.broadcast %7 : f32 to vector<16x128xf32>
    %15 = arith.mulf %14, %13 : vector<16x128xf32>
    %16 = arith.addf %11, %15 : vector<16x128xf32>
    %c2_i32_7 = arith.constant 2 : i32
    %17 = arith.muli %arg0, %c2_i32_7 : i32
    %c1_i32 = arith.constant 1 : i32
    %18 = arith.addi %17, %c1_i32 : i32
    %19 = arith.index_cast %18 : i32 to index
    %20 = memref.load %arg1[%19] : memref<4xf32, #tpu.memory_space<smem>>
    %c2_i32_8 = arith.constant 2 : i32
    %21 = arith.muli %arg0, %c2_i32_8 : i32
    %c1_i32_9 = arith.constant 1 : i32
    %22 = arith.addi %21, %c1_i32_9 : i32
    %23 = arith.index_cast %22 : i32 to index
    %24 = memref.load %arg2[%23] : memref<4xf32, #tpu.memory_space<smem>>
    %c1 = arith.constant 1 : index
    %c0_10 = arith.constant 0 : index
    %c0_11 = arith.constant 0 : index
    %25 = vector.load %arg3[%c1, %c0_10, %c0_11] : memref<2x16x128xf32, #tpu.memory_space<vmem>>, vector<1x16x128xf32>
    %26 = vector.shape_cast %25 : vector<1x16x128xf32> to vector<16x128xf32>
    %27 = vector.broadcast %20 : f32 to vector<16x128xf32>
    %28 = arith.mulf %27, %26 : vector<16x128xf32>
    %c1_12 = arith.constant 1 : index
    %c0_13 = arith.constant 0 : index
    %c0_14 = arith.constant 0 : index
    %29 = vector.load %arg4[%c1_12, %c0_13, %c0_14] : memref<2x16x128xf32, #tpu.memory_space<vmem>>, vector<1x16x128xf32>
    %30 = vector.shape_cast %29 : vector<1x16x128xf32> to vector<16x128xf32>
    %31 = vector.broadcast %24 : f32 to vector<16x128xf32>
    %32 = arith.mulf %31, %30 : vector<16x128xf32>
    %33 = arith.addf %28, %32 : vector<16x128xf32>
    %34 = tpu.concatenate %16, %33 in 0 : vector<16x128xf32>, vector<16x128xf32> -> vector<32x128xf32>
    %35 = arith.truncf %34 : vector<32x128xf32> to vector<32x128xbf16>
    %36 = tpu.iota {dimensions = array<i32: 0>} : vector<32x32xi32>
    %37 = tpu.iota {dimensions = array<i32: 1>} : vector<32x32xi32>
    %c1_i32_15 = arith.constant 1 : i32
    %38 = vector.broadcast %c1_i32_15 : i32 to vector<32x32xi32>
    %39 = arith.addi %37, %38 : vector<32x32xi32>
    %40 = arith.cmpi eq, %39, %36 : vector<32x32xi32>
    %c1_i32_16 = arith.constant 1 : i32
    %41 = vector.broadcast %c1_i32_16 : i32 to vector<32x32xi32>
    %42 = arith.addi %36, %41 : vector<32x32xi32>
    %43 = arith.cmpi eq, %37, %42 : vector<32x32xi32>
    %c0_i32_17 = arith.constant 0 : i32
    %44 = vector.broadcast %c0_i32_17 : i32 to vector<32x32xi32>
    %45 = arith.cmpi ne, %36, %44 : vector<32x32xi32>
    %46 = arith.andi %40, %45 : vector<32x32xi1>
    %c15_i32 = arith.constant 15 : i32
    %47 = vector.broadcast %c15_i32 : i32 to vector<32x32xi32>
    %48 = arith.cmpi ne, %36, %47 : vector<32x32xi32>
    %49 = arith.andi %43, %48 : vector<32x32xi1>
    %c16_i32 = arith.constant 16 : i32
    %50 = vector.broadcast %c16_i32 : i32 to vector<32x32xi32>
    %51 = arith.cmpi ne, %36, %50 : vector<32x32xi32>
    %52 = arith.andi %46, %51 : vector<32x32xi1>
    %c31_i32 = arith.constant 31 : i32
    %53 = vector.broadcast %c31_i32 : i32 to vector<32x32xi32>
    %54 = arith.cmpi ne, %36, %53 : vector<32x32xi32>
    %55 = arith.andi %49, %54 : vector<32x32xi1>
    %cst = arith.constant 1.000000e+00 : f32
    %cst_18 = arith.constant 0.000000e+00 : f32
    %56 = vector.broadcast %cst : f32 to vector<32x32xf32>
    %57 = vector.broadcast %cst_18 : f32 to vector<32x32xf32>
    %58 = arith.select %52, %56, %57 : vector<32x32xi1>, vector<32x32xf32>
    %59 = arith.truncf %58 : vector<32x32xf32> to vector<32x32xbf16>
    %cst_19 = arith.constant 1.000000e+00 : f32
    %cst_20 = arith.constant 0.000000e+00 : f32
    %60 = vector.broadcast %cst_19 : f32 to vector<32x32xf32>
    %61 = vector.broadcast %cst_20 : f32 to vector<32x32xf32>
    %62 = arith.select %55, %60, %61 : vector<32x32xi1>, vector<32x32xf32>
    %63 = arith.truncf %62 : vector<32x32xf32> to vector<32x32xbf16>
    %cst_21 = arith.constant dense<0.000000e+00> : vector<32x128xf32>
    %64 = tpu.matmul %59, %35, %cst_21 {dimension_numbers = #tpu.dot_dimension_numbers<[1], [0], [0], [1], [0, 0, 1, 1], [], []>} : vector<32x32xbf16>, vector<32x128xbf16>, vector<32x128xf32> -> vector<32x128xf32>
    %65 = arith.truncf %64 : vector<32x128xf32> to vector<32x128xbf16>
    %cst_22 = arith.constant dense<0.000000e+00> : vector<32x128xf32>
    %66 = tpu.matmul %63, %35, %cst_22 {dimension_numbers = #tpu.dot_dimension_numbers<[1], [0], [0], [1], [0, 0, 1, 1], [], []>} : vector<32x32xbf16>, vector<32x128xbf16>, vector<32x128xf32> -> vector<32x128xf32>
    %67 = arith.truncf %66 : vector<32x128xf32> to vector<32x128xbf16>
    %68 = tpu.concatenate %65, %35, %67 in 1 : vector<32x128xbf16>, vector<32x128xbf16>, vector<32x128xbf16> -> vector<32x384xbf16>
    %c0_23 = arith.constant 0 : index
    %c0_24 = arith.constant 0 : index
    %69 = vector.load %arg6[%c0_23, %c0_24] : memref<384x128xbf16, #tpu.memory_space<vmem>>, vector<384x128xbf16>
    %cst_25 = arith.constant dense<0.000000e+00> : vector<32x128xf32>
    %70 = tpu.matmul %68, %69, %cst_25 {dimension_numbers = #tpu.dot_dimension_numbers<[1], [0], [0], [1], [0, 0, 1, 1], [], []>} : vector<32x384xbf16>, vector<384x128xbf16>, vector<32x128xf32> -> vector<32x128xf32>
    %cst_26 = arith.constant 0.000000e+00 : f32
    %71 = vector.broadcast %cst_26 : f32 to vector<8x128xf32>
    %72 = vector.extract_strided_slice %70 {offsets = [0, 0], sizes = [16, 128], strides = [1, 1]} : vector<32x128xf32> to vector<16x128xf32>
    %c0_27 = arith.constant 0 : index
    %c0_28 = arith.constant 0 : index
    %c0_29 = arith.constant 0 : index
    %73 = vector.load %arg5[%c0_27, %c0_28, %c0_29] : memref<2x1x128xf32, #tpu.memory_space<vmem>>, vector<1x1x128xf32>
    %74 = vector.shape_cast %73 : vector<1x1x128xf32> to vector<1x128xf32>
    %75 = vector.broadcast %74 : vector<1x128xf32> to vector<16x128xf32>
    %76 = arith.addf %72, %75 : vector<16x128xf32>
    %c0_30 = arith.constant 0 : index
    %c0_31 = arith.constant 0 : index
    %c0_32 = arith.constant 0 : index
    %77 = vector.load %arg4[%c0_30, %c0_31, %c0_32] : memref<2x16x128xf32, #tpu.memory_space<vmem>>, vector<1x16x128xf32>
    %78 = vector.shape_cast %77 : vector<1x16x128xf32> to vector<16x128xf32>
    %79 = arith.subf %76, %78 : vector<16x128xf32>
    %80 = arith.mulf %79, %79 : vector<16x128xf32>
    %81 = vector.extract_strided_slice %80 {offsets = [0, 0], sizes = [8, 128], strides = [1, 1]} : vector<16x128xf32> to vector<8x128xf32>
    %82 = arith.addf %71, %81 : vector<8x128xf32>
    %83 = vector.extract_strided_slice %80 {offsets = [8, 0], sizes = [8, 128], strides = [1, 1]} : vector<16x128xf32> to vector<8x128xf32>
    %84 = arith.addf %82, %83 : vector<8x128xf32>
    %85 = vector.extract_strided_slice %70 {offsets = [16, 0], sizes = [16, 128], strides = [1, 1]} : vector<32x128xf32> to vector<16x128xf32>
    %c1_33 = arith.constant 1 : index
    %c0_34 = arith.constant 0 : index
    %c0_35 = arith.constant 0 : index
    %86 = vector.load %arg5[%c1_33, %c0_34, %c0_35] : memref<2x1x128xf32, #tpu.memory_space<vmem>>, vector<1x1x128xf32>
    %87 = vector.shape_cast %86 : vector<1x1x128xf32> to vector<1x128xf32>
    %88 = vector.broadcast %87 : vector<1x128xf32> to vector<16x128xf32>
    %89 = arith.addf %85, %88 : vector<16x128xf32>
    %c1_36 = arith.constant 1 : index
    %c0_37 = arith.constant 0 : index
    %c0_38 = arith.constant 0 : index
    %90 = vector.load %arg4[%c1_36, %c0_37, %c0_38] : memref<2x16x128xf32, #tpu.memory_space<vmem>>, vector<1x16x128xf32>
    %91 = vector.shape_cast %90 : vector<1x16x128xf32> to vector<16x128xf32>
    %92 = arith.subf %89, %91 : vector<16x128xf32>
    %93 = arith.mulf %92, %92 : vector<16x128xf32>
    %94 = vector.extract_strided_slice %93 {offsets = [0, 0], sizes = [8, 128], strides = [1, 1]} : vector<16x128xf32> to vector<8x128xf32>
    %95 = arith.addf %84, %94 : vector<8x128xf32>
    %96 = vector.extract_strided_slice %93 {offsets = [8, 0], sizes = [8, 128], strides = [1, 1]} : vector<16x128xf32> to vector<8x128xf32>
    %97 = arith.addf %95, %96 : vector<8x128xf32>
    %c0_39 = arith.constant 0 : index
    %c0_40 = arith.constant 0 : index
    %c0_41 = arith.constant 0 : index
    %98 = vector.load %arg7[%c0_39, %c0_40, %c0_41] : memref<1x8x128xf32, #tpu.memory_space<vmem>>, vector<1x8x128xf32>
    %99 = vector.shape_cast %98 : vector<1x8x128xf32> to vector<8x128xf32>
    %100 = vector.shape_cast %97 : vector<8x128xf32> to vector<1x8x128xf32>
    tpu.vector_store %arg7[%c0_39, %c0_40, %c0_41], %100 {strides = array<i32>} : memref<1x8x128xf32, #tpu.memory_space<vmem>>, vector<1x8x128xf32>,
    return
  }
  func.func @transform_0(%arg0: i32) -> i32 {
    %c0_i32 = arith.constant 0 : i32
    %c0_i32_0 = arith.constant 0 : i32
    return %c0_i32 : i32
  }
  func.func @transform_1(%arg0: i32) -> i32 {
    %c0_i32 = arith.constant 0 : i32
    %c0_i32_0 = arith.constant 0 : i32
    return %c0_i32 : i32
  }
  func.func @transform_2(%arg0: i32) -> (i32, i32, i32) {
    %c0_i32 = arith.constant 0 : i32
    %c0_i32_0 = arith.constant 0 : i32
    %c0_i32_1 = arith.constant 0 : i32
    return %arg0, %c0_i32, %c0_i32_0 : i32, i32, i32
  }
  func.func @transform_3(%arg0: i32) -> (i32, i32, i32) {
    %c0_i32 = arith.constant 0 : i32
    %c0_i32_0 = arith.constant 0 : i32
    %c0_i32_1 = arith.constant 0 : i32
    return %arg0, %c0_i32, %c0_i32_0 : i32, i32, i32
  }
  func.func @transform_4(%arg0: i32) -> (i32, i32, i32) {
    %c0_i32 = arith.constant 0 : i32
    %c0_i32_0 = arith.constant 0 : i32
    %c0_i32_1 = arith.constant 0 : i32
    return %arg0, %c0_i32, %c0_i32_0 : i32, i32, i32
  }
  func.func @transform_5(%arg0: i32) -> (i32, i32) {
    %c0_i32 = arith.constant 0 : i32
    %c0_i32_0 = arith.constant 0 : i32
    %c0_i32_1 = arith.constant 0 : i32
    return %c0_i32, %c0_i32_0 : i32, i32
  }
  func.func @transform_6(%arg0: i32) -> (i32, i32, i32) {
    %c0_i32 = arith.constant 0 : i32
    %c0_i32_0 = arith.constant 0 : i32
    %c0_i32_1 = arith.constant 0 : i32
    return %arg0, %c0_i32, %c0_i32_0 : i32, i32, i32
  }
}

</mosaic_0001>

<llo_original>
// kernel: gaussian_diffusion_p_losses.1
$region0: #{gaussian_diffusion_p_losses.1}
  #allocation0 [shape = 'u32[]', space=smem, size = 0x4, offset = 0x4, fixed_abs, tag = 'smem constant byte address 0x4 - core index']
  #allocation1 [shape = 'u32[144,128]{1,0:T(1,128)}', space=vmem, size = 0x12000, scoped, tag = 'internal scratch']
  %s0 = inlined_call_operand.vmem [shape: f32[4], index: 0, kind: input, shape index: {}]
  %s1 = inlined_call_operand.vmem [shape: f32[4], index: 1, kind: input, shape index: {}]
  %s2 = inlined_call_operand.vmem [shape: f32[4,16,128], index: 2, kind: input, shape index: {}]
  %s3 = inlined_call_operand.vmem [shape: f32[4,16,128], index: 3, kind: input, shape index: {}]
  %s4 = inlined_call_operand.vmem [shape: f32[4,1,128], index: 4, kind: input, shape index: {}]
  %s5 = inlined_call_operand.vmem [shape: bf16[384,128], index: 5, kind: input, shape index: {}]
  %s6 = inlined_call_operand.vmem [shape: f32[2,8,128], index: 6, kind: output, shape index: {}]
  %s7 = sld [smem:[#allocation0]]
  $region65: #{gaussian_diffusion_p_losses.1} parent=0
    _
  %s9 = ssub.s32 1, %s7
  %s10 = scalar_select 0, %s9, %s7
  $region1: #{gaussian_diffusion_p_losses.1} parent=0
    #allocation2 [shape = 'u8[512]{0}', space=smem, size = 0x200, scoped, tag = 'input window, operand 0, single buffered']
    #allocation3 [shape = 's32[2]{0}', space=sflag, size = 0x8, scoped, tag = 'scoped memory for gaussian_diffusion_p_losses.1']
    #allocation4 [shape = 'u8[512]{0}', space=smem, size = 0x200, scoped, tag = 'input window, operand 1, single buffered']
    #allocation5 [shape = 's32[1]{0}', space=sflag, size = 0x4, scoped, tag = 'scoped memory for gaussian_diffusion_p_losses.1']
    %11 = vsyncpa [#allocation3], 0
    %12 = vsyncpa [#allocation5], 0
    loop: start=0, step=1, limit=4
    $region2: #{gaussian_diffusion_p_losses.1} parent=1 // loop_pre_header
      _
    $region3: #{gaussian_diffusion_p_losses.1} parent=1 // loop_header
      %s14 = sphi 0, %s18
      %p15 = scmp.ge.s32.totalorder %s14, 4
      %s22 = sphi 0, %s22
      %s24 = sphi 0, %s22
      %s25 = sphi 0, %s24
      %s39 = sphi 0, %s25
      %s43 = sphi 0, %s43
      %s45 = sphi 0, %s43
      %s46 = sphi 0, %s45
      %s60 = sphi 0, %s46
      %s66 = sphi 0, %s68
      %s69 = sphi 0, %s66
      %s70 = sphi 0, %s69
      %s86 = sphi 0, %s70
      %s92 = sphi 0, %s94
      %s95 = sphi 0, %s92
      %s96 = sphi 0, %s95
      %s112 = sphi 0, %s96
      %s118 = sphi 0, %s120
      %s121 = sphi 0, %s118
      %s122 = sphi 0, %s121
      %s138 = sphi 0, %s122
      %s142 = sphi 0, %s142
      %s144 = sphi 0, %s142
      %s145 = sphi 0, %s144
      %s159 = sphi 0, %s145
      %s165 = sphi 0, %s167
      %s168 = sphi 0, %s165
      %s169 = sphi 0, %s168
      %s185 = sphi 0, %s169
    $region4: #{gaussian_diffusion_p_losses.1} parent=1 // loop_header_branch
      %17 = sbr.rel (%p15) target = $region8
    $region5: #{gaussian_diffusion_p_losses.1} parent=1 // loop_body
      %s19 = ssub.s32 %s14, 1
      %s20 = ssub.s32 %s14, 2
      %s21 = sadd.s32 %s14, 1
      %s23 = sadd.s32 %s22, 1
      %p26 = scmp.eq.s32.totalorder %s14, 1
      %p27 = scmp.ne.s32.totalorder %s22, %s24
      %p28 = scmp.eq.s32.totalorder %s14, 0
      %p29 = por %p27, %p28
      %p30 = scmp.ne.s32.totalorder %s22, %s24
      %p31 = scmp.eq.s32.totalorder %s19, 1
      %p32 = por %p30, %p31
      %p33 = scmp.ne.s32.totalorder %s24, %s25
      %p34 = scmp.eq.s32.totalorder %s19, 0
      %p35 = por %p33, %p34
      %p36 = scmp.ne.s32.totalorder %s24, %s25
      %p37 = scmp.eq.s32.totalorder %s20, 1
      %p38 = por %p36, %p37
      %p40 = scmp.ne.s32.totalorder %s25, %s39
      %p41 = scmp.eq.s32.totalorder %s20, 0
      %p42 = por %p40, %p41
      %s44 = sadd.s32 %s43, 1
      %p47 = scmp.eq.s32.totalorder %s14, 1
      %p48 = scmp.ne.s32.totalorder %s43, %s45
      %p49 = scmp.eq.s32.totalorder %s14, 0
      %p50 = por %p48, %p49
      %p51 = scmp.ne.s32.totalorder %s43, %s45
      %p52 = scmp.eq.s32.totalorder %s19, 1
      %p53 = por %p51, %p52
      %p54 = scmp.ne.s32.totalorder %s45, %s46
      %p55 = scmp.eq.s32.totalorder %s19, 0
      %p56 = por %p54, %p55
      %p57 = scmp.ne.s32.totalorder %s45, %s46
      %p58 = scmp.eq.s32.totalorder %s20, 1
      %p59 = por %p57, %p58
      %p61 = scmp.ne.s32.totalorder %s46, %s60
      %p62 = scmp.eq.s32.totalorder %s20, 0
      %p63 = por %p61, %p62
      %s64 = ssub.s32 %s14, %s21
      %p65 = scmp.eq.s32.totalorder %s64, 0
      %s67 = sadd.s32 %s66, 1
      %s68 = scalar_select %p65, %s66, %s67
      %p71 = pneg %p65
      %p72 = scmp.eq.s32.totalorder %s14, 1
      %p73 = por %p71, %p72
      %p74 = scmp.ne.s32.totalorder %s66, %s69
      %p75 = scmp.eq.s32.totalorder %s14, 0
      %p76 = por %p74, %p75
      %p77 = scmp.ne.s32.totalorder %s66, %s69
      %p78 = scmp.eq.s32.totalorder %s19, 1
      %p79 = por %p77, %p78
      %p80 = scmp.ne.s32.totalorder %s69, %s70
      %p81 = scmp.eq.s32.totalorder %s19, 0
      %p82 = por %p80, %p81
      %p83 = scmp.ne.s32.totalorder %s69, %s70
      %p84 = scmp.eq.s32.totalorder %s20, 1
      %p85 = por %p83, %p84
      %p87 = scmp.ne.s32.totalorder %s70, %s86
      %p88 = scmp.eq.s32.totalorder %s20, 0
      %p89 = por %p87, %p88
      %s90 = ssub.s32 %s14, %s21
      %p91 = scmp.eq.s32.totalorder %s90, 0
      %s93 = sadd.s32 %s92, 1
      %s94 = scalar_select %p91, %s92, %s93
      %p97 = pneg %p91
      %p98 = scmp.eq.s32.totalorder %s14, 1
      %p99 = por %p97, %p98
      %p100 = scmp.ne.s32.totalorder %s92, %s95
      %p101 = scmp.eq.s32.totalorder %s14, 0
      %p102 = por %p100, %p101
      %p103 = scmp.ne.s32.totalorder %s92, %s95
      %p104 = scmp.eq.s32.totalorder %s19, 1
      %p105 = por %p103, %p104
      %p106 = scmp.ne.s32.totalorder %s95, %s96
      %p107 = scmp.eq.s32.totalorder %s19, 0
      %p108 = por %p106, %p107
      %p109 = scmp.ne.s32.totalorder %s95, %s96
      %p110 = scmp.eq.s32.totalorder %s20, 1
      %p111 = por %p109, %p110
      %p113 = scmp.ne.s32.totalorder %s96, %s112
      %p114 = scmp.eq.s32.totalorder %s20, 0
      %p115 = por %p113, %p114
      %s116 = ssub.s32 %s14, %s21
      %p117 = scmp.eq.s32.totalorder %s116, 0
      %s119 = sadd.s32 %s118, 1
      %s120 = scalar_select %p117, %s118, %s119
      %p123 = pneg %p117
      %p124 = scmp.eq.s32.totalorder %s14, 1
      %p125 = por %p123, %p124
      %p126 = scmp.ne.s32.totalorder %s118, %s121
      %p127 = scmp.eq.s32.totalorder %s14, 0
      %p128 = por %p126, %p127
      %p129 = scmp.ne.s32.totalorder %s118, %s121
      %p130 = scmp.eq.s32.totalorder %s19, 1
      %p131 = por %p129, %p130
      %p132 = scmp.ne.s32.totalorder %s121, %s122
      %p133 = scmp.eq.s32.totalorder %s19, 0
      %p134 = por %p132, %p133
      %p135 = scmp.ne.s32.totalorder %s121, %s122
      %p136 = scmp.eq.s32.totalorder %s20, 1
      %p137 = por %p135, %p136
      %p139 = scmp.ne.s32.totalorder %s122, %s138
      %p140 = scmp.eq.s32.totalorder %s20, 0
      %p141 = por %p139, %p140
      %s143 = sadd.s32 %s142, 1
      %p146 = scmp.eq.s32.totalorder %s14, 1
      %p147 = scmp.ne.s32.totalorder %s142, %s144
      %p148 = scmp.eq.s32.totalorder %s14, 0
      %p149 = por %p147, %p148
      %p150 = scmp.ne.s32.totalorder %s142, %s144
      %p151 = scmp.eq.s32.totalorder %s19, 1
      %p152 = por %p150, %p151
      %p153 = scmp.ne.s32.totalorder %s144, %s145
      %p154 = scmp.eq.s32.totalorder %s19, 0
      %p155 = por %p153, %p154
      %p156 = scmp.ne.s32.totalorder %s144, %s145
      %p157 = scmp.eq.s32.totalorder %s20, 1
      %p158 = por %p156, %p157
      %p160 = scmp.ne.s32.totalorder %s145, %s159
      %p161 = scmp.eq.s32.totalorder %s20, 0
      %p162 = por %p160, %p161
      %s163 = ssub.s32 %s14, %s21
      %p164 = scmp.eq.s32.totalorder %s163, 0
      %s166 = sadd.s32 %s165, 1
      %s167 = scalar_select %p164, %s165, %s166
      %p170 = pneg %p164
      %p171 = scmp.eq.s32.totalorder %s14, 1
      %p172 = por %p170, %p171
      %p173 = scmp.ne.s32.totalorder %s165, %s168
      %p174 = scmp.eq.s32.totalorder %s14, 0
      %p175 = por %p173, %p174
      %p176 = scmp.ne.s32.totalorder %s165, %s168
      %p177 = scmp.eq.s32.totalorder %s19, 1
      %p178 = por %p176, %p177
      %p179 = scmp.ne.s32.totalorder %s168, %s169
      %p180 = scmp.eq.s32.totalorder %s19, 0
      %p181 = por %p179, %p180
      %p182 = scmp.ne.s32.totalorder %s168, %s169
      %p183 = scmp.eq.s32.totalorder %s20, 1
      %p184 = por %p182, %p183
      %p186 = scmp.ne.s32.totalorder %s169, %s185
      %p187 = scmp.eq.s32.totalorder %s20, 0
      %p188 = por %p186, %p187
      %p189 = scmp.le.s32.totalorder 1, %s14
      %p190 = scmp.lt.s32.totalorder %s14, 3
      %p191 = pnand %p189, %p190
      %p192 = pneg %p191
      // Predicated region
      $region9: #{gaussian_diffusion_p_losses.1} parent=5 // pred_check
        _
      $region10: #{gaussian_diffusion_p_losses.1} parent=5 // pred_check_branch
        %194 = sbr.rel (%p191) target = $region12
      $region11: #{gaussian_diffusion_p_losses.1} parent=5 // pred_region
        %s195 = ssub.s32 %s14, 1
        // Predicated region
        $region13: #{gaussian_diffusion_p_losses.1} parent=11 // pred_check
          %p196 = pneg %p35
        $region14: #{gaussian_diffusion_p_losses.1} parent=11 // pred_check_branch
          %198 = sbr.rel (%p196) target = $region16
        $region15: #{gaussian_diffusion_p_losses.1} parent=11 // pred_region
          %s200 = ssub.s32 16, 16
          %201 = vsyncadd [#allocation3], %s200
          %s203 = sshll.u32 %s0, 4
          %s204 = int_to_ptr.vmem [resolvable:$true] %s203
          %206 = dma.vmem_to_smem %s204, 16, [#allocation2], [#allocation3]
        $region16: #{gaussian_diffusion_p_losses.1} parent=11 // pred_fallthru
          _
        // Predicated region
        $region17: #{gaussian_diffusion_p_losses.1} parent=11 // pred_check
          %p207 = pneg %p56
        $region18: #{gaussian_diffusion_p_losses.1} parent=11 // pred_check_branch
          %209 = sbr.rel (%p207) target = $region20
        $region19: #{gaussian_diffusion_p_losses.1} parent=11 // pred_region
          %s211 = ssub.s32 16, 16
          %212 = vsyncadd [#allocation5], %s211
          %s214 = sshll.u32 %s1, 4
          %s215 = int_to_ptr.vmem [resolvable:$true] %s214
          %217 = dma.vmem_to_smem %s215, 16, [#allocation4], [#allocation5]
        $region20: #{gaussian_diffusion_p_losses.1} parent=11 // pred_fallthru
          _
        // Predicated region
        $region21: #{gaussian_diffusion_p_losses.1} parent=11 // pred_check
          %p218 = pneg %p155
        $region22: #{gaussian_diffusion_p_losses.1} parent=11 // pred_check_branch
          %220 = sbr.rel (%p218) target = $region24
        $region23: #{gaussian_diffusion_p_losses.1} parent=11 // pred_region
          _
        $region24: #{gaussian_diffusion_p_losses.1} parent=11 // pred_fallthru
          _
      $region12: #{gaussian_diffusion_p_losses.1} parent=5 // pred_fallthru
        _
      %p221 = scmp.lt.s32.totalorder %s14, 2
      // Predicated region
      $region25: #{gaussian_diffusion_p_losses.1} parent=5 // pred_check
        %p222 = pneg %p221
      $region26: #{gaussian_diffusion_p_losses.1} parent=5 // pred_check_branch
        %224 = sbr.rel (%p222) target = $region28
      $region27: #{gaussian_diffusion_p_losses.1} parent=5 // pred_region
        // Predicated region
        $region29: #{gaussian_diffusion_p_losses.1} parent=27 // pred_check
          %p225 = pneg %p76
        $region30: #{gaussian_diffusion_p_losses.1} parent=27 // pred_check_branch
          %227 = sbr.rel (%p225) target = $region32
        $region31: #{gaussian_diffusion_p_losses.1} parent=27 // pred_region
          %s228 = smul.u32 2, %s14
          %p229 = scmp.lt.s32.totalorder %s228, 3
          %s230 = scalar_select %p229, %s228, 3
          %s231 = smul.addr %s230, 2
          %s232 = smul.addr %s231, 8
          %s233 = scalar_lea.vmem %s2, %s232
          %s234 = smul.u32 2, %s14
        $region32: #{gaussian_diffusion_p_losses.1} parent=27 // pred_fallthru
          _
        // Predicated region
        $region33: #{gaussian_diffusion_p_losses.1} parent=27 // pred_check
          %p235 = pneg %p102
        $region34: #{gaussian_diffusion_p_losses.1} parent=27 // pred_check_branch
          %237 = sbr.rel (%p235) target = $region36
        $region35: #{gaussian_diffusion_p_losses.1} parent=27 // pred_region
          %s238 = smul.u32 2, %s14
          %p239 = scmp.lt.s32.totalorder %s238, 3
          %s240 = scalar_select %p239, %s238, 3
          %s241 = smul.addr %s240, 2
          %s242 = smul.addr %s241, 8
          %s243 = scalar_lea.vmem %s3, %s242
          %s244 = smul.u32 2, %s14
        $region36: #{gaussian_diffusion_p_losses.1} parent=27 // pred_fallthru
          _
        // Predicated region
        $region37: #{gaussian_diffusion_p_losses.1} parent=27 // pred_check
          %p245 = pneg %p128
        $region38: #{gaussian_diffusion_p_losses.1} parent=27 // pred_check_branch
          %247 = sbr.rel (%p245) target = $region40
        $region39: #{gaussian_diffusion_p_losses.1} parent=27 // pred_region
          %s248 = smul.u32 2, %s14
          %p249 = scmp.lt.s32.totalorder %s248, 3
          %s250 = scalar_select %p249, %s248, 3
          %s251 = scalar_lea.vmem %s4, %s250
          %s252 = smul.u32 2, %s14
        $region40: #{gaussian_diffusion_p_losses.1} parent=27 // pred_fallthru
          _
      $region28: #{gaussian_diffusion_p_losses.1} parent=5 // pred_fallthru
        _
      %p253 = scmp.le.s32.totalorder 1, %s14
      %p254 = scmp.lt.s32.totalorder %s14, 3
      %p255 = pnand %p253, %p254
      %p256 = pneg %p255
      // Predicated region
      $region41: #{gaussian_diffusion_p_losses.1} parent=5 // pred_check
        _
      $region42: #{gaussian_diffusion_p_losses.1} parent=5 // pred_check_branch
        %258 = sbr.rel (%p255) target = $region44
      $region43: #{gaussian_diffusion_p_losses.1} parent=5 // pred_region
        %s259 = ssub.s32 %s14, 1
        // Predicated region
        $region45: #{gaussian_diffusion_p_losses.1} parent=43 // pred_check
          %p260 = pneg %p35
        $region46: #{gaussian_diffusion_p_losses.1} parent=43 // pred_check_branch
          %262 = sbr.rel (%p260) target = $region48
        $region47: #{gaussian_diffusion_p_losses.1} parent=43 // pred_region
          %263 = dma.done [#allocation3], 16
        $region48: #{gaussian_diffusion_p_losses.1} parent=43 // pred_fallthru
          _
        // Predicated region
        $region49: #{gaussian_diffusion_p_losses.1} parent=43 // pred_check
          %p264 = pneg %p56
        $region50: #{gaussian_diffusion_p_losses.1} parent=43 // pred_check_branch
          %266 = sbr.rel (%p264) target = $region52
        $region51: #{gaussian_diffusion_p_losses.1} parent=43 // pred_region
          %267 = dma.done [#allocation5], 16
        $region52: #{gaussian_diffusion_p_losses.1} parent=43 // pred_fallthru
          _
        %268 = sfence
        %p269 = pneg %p35
        %p270 = pneg %p32
        %p271 = pneg %p56
        %p272 = pneg %p53
        %s273 = smul.u32 2, %s19
        %p274 = scmp.lt.s32.totalorder %s273, 3
        %s275 = scalar_select %p274, %s273, 3
        %s276 = smul.addr %s275, 2
        %s277 = smul.addr %s276, 8
        %s278 = scalar_lea.vmem %s2, %s277
        %p279 = pneg %p82
        %p280 = pneg %p79
        %s281 = smul.u32 2, %s19
        %p282 = scmp.lt.s32.totalorder %s281, 3
        %s283 = scalar_select %p282, %s281, 3
        %s284 = smul.addr %s283, 2
        %s285 = smul.addr %s284, 8
        %s286 = scalar_lea.vmem %s3, %s285
        %p287 = pneg %p108
        %p288 = pneg %p105
        %s289 = smul.u32 2, %s19
        %p290 = scmp.lt.s32.totalorder %s289, 3
        %s291 = scalar_select %p290, %s289, 3
        %s292 = scalar_lea.vmem %s4, %s291
        %p293 = pneg %p134
        %p294 = pneg %p131
        %p295 = pneg %p155
        %p296 = pneg %p152
        %p297 = pneg %p181
        %p298 = pneg %p178
        %p299 = scmp.lt.s32.totalorder %s19, 1
        %s300 = scalar_select %p299, %s19, 1
        %s301 = smul.addr %s300, 8
        %s302 = scalar_lea.vmem %s6, %s301
        %s303 = smul.u32 2, %s19
        %p304 = scmp.lt.s32.totalorder %s303, 3
        %s305 = scalar_select %p304, %s303, 3
        %s306 = smul.addr %s305, 2
        %s307 = smul.addr %s306, 8
        %s308 = scalar_lea.vmem %s2, %s307
        %s309 = smul.u32 2, %s19
        %s310 = smul.u32 2, %s19
        %p311 = scmp.lt.s32.totalorder %s310, 3
        %s312 = scalar_select %p311, %s310, 3
        %s313 = smul.addr %s312, 2
        %s314 = smul.addr %s313, 8
        %s315 = scalar_lea.vmem %s3, %s314
        %s316 = smul.u32 2, %s19
        %s317 = smul.u32 2, %s19
        %p318 = scmp.lt.s32.totalorder %s317, 3
        %s319 = scalar_select %p318, %s317, 3
        %s320 = scalar_lea.vmem %s4, %s319
        %s321 = smul.u32 2, %s19
        %p322 = scmp.lt.s32.totalorder %s19, 1
        %s323 = scalar_select %p322, %s19, 1
        %s324 = smul.addr %s323, 8
        %s325 = scalar_lea.vmem %s6, %s324
        %s327 = smul.u32 %s19, 2
        %s328 = sld [smem:[#allocation2 + %s327]]
        %s329 = sld [smem:[#allocation4 + %s327]]
        %v330 = vld [vmem:[%s308] sm:$0xff]
        %v331 = vld [vmem:[%s308 + $0x8] sm:$0xff]
        %v332 = vstv %s328
        %v333 = vmul.f32 %v332, %v330
        %v334 = vmul.f32 %v332, %v331
        %v335 = vld [vmem:[%s315] sm:$0xff]
        %v336 = vld [vmem:[%s315 + $0x8] sm:$0xff]
        %v337 = vstv %s329
        %v338 = vmul.f32 %v337, %v335
        %v339 = vmul.f32 %v337, %v336
        %v340 = vadd.f32 %v333, %v338
        %v341 = vadd.f32 %v334, %v339
        %s342 = sadd.s32 %s327, 1
        %s343 = sld [smem:[#allocation2 + %s342]]
        %s344 = sld [smem:[#allocation4 + %s342]]
        %s345 = scalar_lea.vmem %s308, 16
        %v346 = vld [vmem:[%s345] sm:$0xff]
        %v347 = vld [vmem:[%s345 + $0x8] sm:$0xff]
        %v348 = vstv %s343
        %v349 = vmul.f32 %v348, %v346
        %v350 = vmul.f32 %v348, %v347
        %s351 = scalar_lea.vmem %s315, 16
        %v352 = vld [vmem:[%s351] sm:$0xff]
        %v353 = vld [vmem:[%s351 + $0x8] sm:$0xff]
        %v354 = vstv %s344
        %v355 = vmul.f32 %v354, %v352
        %v356 = vmul.f32 %v354, %v353
        %v357 = vadd.f32 %v349, %v355
        %v358 = vadd.f32 %v350, %v356
        %v359 = vpack.c.bf16 %v341, %v340
        %v360 = vpack.c.bf16 %v358, %v357
        %v361 = vlaneseq
        %v362 = vshrl.u32 %v361, 7
        %v363 = vadd.s32 %v362, 8
        %v364 = vadd.s32 %v362, 16
        %v365 = vadd.s32 %v362, 24
        %v366 = vlaneseq
        %v367 = vand.u32 %v366, 127
        %v368 = vadd.s32 %v367, 1
        %vm369 = vcmp.eq.s32.totalorder %v368, %v362
        %vm370 = vcmp.eq.s32.totalorder %v368, %v363
        %vm371 = vcmp.eq.s32.totalorder %v368, %v364
        %vm372 = vcmp.eq.s32.totalorder %v368, %v365
        %v373 = vadd.s32 %v362, 1
        %v374 = vadd.s32 %v363, 1
        %v375 = vadd.s32 %v364, 1
        %v376 = vadd.s32 %v365, 1
        %vm377 = vcmp.eq.s32.totalorder %v367, %v373
        %vm378 = vcmp.eq.s32.totalorder %v367, %v374
        %vm379 = vcmp.eq.s32.totalorder %v367, %v375
        %vm380 = vcmp.eq.s32.totalorder %v367, %v376
        %vm381 = vcmp.ne.s32.totalorder %v362, 0
        %vm382 = vcmp.ne.s32.totalorder %v363, 0
        %vm383 = vcmp.ne.s32.totalorder %v364, 0
        %vm384 = vcmp.ne.s32.totalorder %v365, 0
        %vm385 = vmand %vm369, %vm381
        %vm386 = vmand %vm370, %vm382
        %vm387 = vmand %vm371, %vm383
        %vm388 = vmand %vm372, %vm384
        %vm389 = vcmp.ne.s32.totalorder %v362, 15
        %vm390 = vcmp.ne.s32.totalorder %v363, 15
        %vm391 = vcmp.ne.s32.totalorder %v364, 15
        %vm392 = vcmp.ne.s32.totalorder %v365, 15
        %vm393 = vmand %vm377, %vm389
        %vm394 = vmand %vm378, %vm390
        %vm395 = vmand %vm379, %vm391
        %vm396 = vmand %vm380, %vm392
        %vm397 = vcmp.ne.s32.totalorder %v362, 16
        %vm398 = vcmp.ne.s32.totalorder %v363, 16
        %vm399 = vcmp.ne.s32.totalorder %v364, 16
        %vm400 = vcmp.ne.s32.totalorder %v365, 16
        %vm401 = vmand %vm385, %vm397
        %vm402 = vmand %vm386, %vm398
        %vm403 = vmand %vm387, %vm399
        %vm404 = vmand %vm388, %vm400
        %vm405 = vcmp.ne.s32.totalorder %v362, 31
        %vm406 = vcmp.ne.s32.totalorder %v363, 31
        %vm407 = vcmp.ne.s32.totalorder %v364, 31
        %vm408 = vcmp.ne.s32.totalorder %v365, 31
        %vm409 = vmand %vm393, %vm405
        %vm410 = vmand %vm394, %vm406
        %vm411 = vmand %vm395, %vm407
        %vm412 = vmand %vm396, %vm408
        %v413 = vsel %vm401, 1.0, 0.0
        %v414 = vsel %vm402, 1.0, 0.0
        %v415 = vsel %vm403, 1.0, 0.0
        %v416 = vsel %vm404, 1.0, 0.0
        %v417 = vpack.c.bf16 %v414, %v413
        %v418 = vpack.c.bf16 %v416, %v415
        %v419 = vsel %vm409, 1.0, 0.0
        %v420 = vsel %vm410, 1.0, 0.0
        %v421 = vsel %vm411, 1.0, 0.0
        %v422 = vsel %vm412, 1.0, 0.0
        %v423 = vpack.c.bf16 %v420, %v419
        %v424 = vpack.c.bf16 %v422, %v421
        %vm425 = vcmask 261120
        %v427 = vsel %vm425, %v417, 0
        %v430 = vsel %vm425, %v418, 0
        %432 = vmatprep.subr.bf16.mxu0 0
        %433 = vmatpush1.bf16.msra.mxu0 %v359
        %434 = vmatprep.subr.bf16.mxu0 0
        %435 = vmatpush1.bf16.msra.mxu0 %v360
        %436 = vmatprep.subr.bf16.mxu0 0
        %437 = vmatpush1.bf16.msra.mxu0 0
        %438 = vmatprep.subr.bf16.mxu0 0
        %439 = vmatpush1.bf16.msra.mxu0 0
        %440 = vmatprep.subr.bf16.mxu0 0
        %441 = vmatpush1.bf16.msra.mxu0 0
        %442 = vmatprep.subr.bf16.mxu0 0
        %443 = vmatpush1.bf16.msra.mxu0 0
        %444 = vmatprep.subr.bf16.mxu0 0
        %445 = vmatpush1.bf16.msra.mxu0 0
        %446 = vmatprep.subr.bf16.mxu0 0
        %447 = vmatpush1.bf16.msra.mxu0 0
        %448 = vmatprep.subr.bf16.mxu0 0
        %449 = vmatpush1.bf16.msra.mxu0 0
        %450 = vmatprep.subr.bf16.mxu0 0
        %451 = vmatpush1.bf16.msra.mxu0 0
        %452 = vmatprep.subr.bf16.mxu0 0
        %453 = vmatpush1.bf16.msra.mxu0 0
        %454 = vmatprep.subr.bf16.mxu0 0
        %455 = vmatpush1.bf16.msra.mxu0 0
        %456 = vmatprep.subr.bf16.mxu0 0
        %457 = vmatpush1.bf16.msra.mxu0 0
        %458 = vmatprep.subr.bf16.mxu0 0
        %459 = vmatpush1.bf16.msra.mxu0 0
        %460 = vmatprep.subr.bf16.mxu0 0
        %461 = vmatpush1.bf16.msra.mxu0 0
        %462 = vmatprep.subr.bf16.mxu0 0
        %463 = vmatpush1.bf16.msra.mxu0 0
        %464 = vmatprep.mubr.bf16.mxu0 0
        %465 = vmatmul.mubr.bf16.gmra.mrb[0].mxu0 %v427
        %v466 = vpop.f32.mrb[0].mxu0
        %v467 = vadd.f32 0.0, %v466
        %v468 = vpop.f32.mrb[0].mxu0
        %v469 = vpop.f32.mrb[0].mxu0
        %v470 = vadd.f32 0.0, %v469
        %v471 = vpop.f32.mrb[0].mxu0
        %472 = vmatprep.mubr.bf16.mxu0 0
        %473 = vmatmul.mubr.bf16.gmra.mrb[0].mxu0 %v430
        %v474 = vpop.f32.mrb[0].mxu0
        %v475 = vadd.f32 0.0, %v474
        %v476 = vpop.f32.mrb[0].mxu0
        %v477 = vpop.f32.mrb[0].mxu0
        %v478 = vadd.f32 0.0, %v477
        %v479 = vpop.f32.mrb[0].mxu0
        %480 = vdwg.mxu0
        %v481 = vpack.c.bf16 %v470, %v467
        %v482 = vpack.c.bf16 %v478, %v475
        %v484 = vsel %vm425, %v423, 0
        %v487 = vsel %vm425, %v424, 0
        %489 = vmatprep.subr.bf16.mxu0 0
        %490 = vmatpush1.bf16.msra.mxu0 %v359
        %491 = vmatprep.subr.bf16.mxu0 0
        %492 = vmatpush1.bf16.msra.mxu0 %v360
        %493 = vmatprep.subr.bf16.mxu0 0
        %494 = vmatpush1.bf16.msra.mxu0 0
        %495 = vmatprep.subr.bf16.mxu0 0
        %496 = vmatpush1.bf16.msra.mxu0 0
        %497 = vmatprep.subr.bf16.mxu0 0
        %498 = vmatpush1.bf16.msra.mxu0 0
        %499 = vmatprep.subr.bf16.mxu0 0
        %500 = vmatpush1.bf16.msra.mxu0 0
        %501 = vmatprep.subr.bf16.mxu0 0
        %502 = vmatpush1.bf16.msra.mxu0 0
        %503 = vmatprep.subr.bf16.mxu0 0
        %504 = vmatpush1.bf16.msra.mxu0 0
        %505 = vmatprep.subr.bf16.mxu0 0
        %506 = vmatpush1.bf16.msra.mxu0 0
        %507 = vmatprep.subr.bf16.mxu0 0
        %508 = vmatpush1.bf16.msra.mxu0 0
        %509 = vmatprep.subr.bf16.mxu0 0
        %510 = vmatpush1.bf16.msra.mxu0 0
        %511 = vmatprep.subr.bf16.mxu0 0
        %512 = vmatpush1.bf16.msra.mxu0 0
        %513 = vmatprep.subr.bf16.mxu0 0
        %514 = vmatpush1.bf16.msra.mxu0 0
        %515 = vmatprep.subr.bf16.mxu0 0
        %516 = vmatpush1.bf16.msra.mxu0 0
        %517 = vmatprep.subr.bf16.mxu0 0
        %518 = vmatpush1.bf16.msra.mxu0 0
        %519 = vmatprep.subr.bf16.mxu0 0
        %520 = vmatpush1.bf16.msra.mxu0 0
        %521 = vmatprep.mubr.bf16.mxu0 0
        %522 = vmatmul.mubr.bf16.gmra.mrb[0].mxu0 %v484
        %v523 = vpop.f32.mrb[0].mxu0
        %v524 = vadd.f32 0.0, %v523
        %v525 = vpop.f32.mrb[0].mxu0
        %v526 = vpop.f32.mrb[0].mxu0
        %v527 = vadd.f32 0.0, %v526
        %v528 = vpop.f32.mrb[0].mxu0
        %529 = vmatprep.mubr.bf16.mxu0 0
        %530 = vmatmul.mubr.bf16.gmra.mrb[0].mxu0 %v487
        %v531 = vpop.f32.mrb[0].mxu0
        %v532 = vadd.f32 0.0, %v531
        %v533 = vpop.f32.mrb[0].mxu0
        %v534 = vpop.f32.mrb[0].mxu0
        %v535 = vadd.f32 0.0, %v534
        %v536 = vpop.f32.mrb[0].mxu0
        %537 = vdwg.mxu0
        %v538 = vpack.c.bf16 %v527, %v524
        %v539 = vpack.c.bf16 %v535, %v532
        %v540 = vld [vmem:[%s5] sm:$0xf]
        %v541 = vld [vmem:[%s5 + $0x4] sm:$0xf]
        %v542 = vld [vmem:[%s5 + $0x8] sm:$0xf]
        %v543 = vld [vmem:[%s5 + $0xc] sm:$0xf]
        %v544 = vld [vmem:[%s5 + $0x10] sm:$0xf]
        %v545 = vld [vmem:[%s5 + $0x14] sm:$0xf]
        %v546 = vld [vmem:[%s5 + $0x18] sm:$0xf]
        %v547 = vld [vmem:[%s5 + $0x1c] sm:$0xf]
        %v548 = vld [vmem:[%s5 + $0x20] sm:$0xf]
        %v549 = vld [vmem:[%s5 + $0x24] sm:$0xf]
        %v550 = vld [vmem:[%s5 + $0x28] sm:$0xf]
        %v551 = vld [vmem:[%s5 + $0x2c] sm:$0xf]
        %v552 = vld [vmem:[%s5 + $0x30] sm:$0xf]
        %v553 = vld [vmem:[%s5 + $0x34] sm:$0xf]
        %v554 = vld [vmem:[%s5 + $0x38] sm:$0xf]
        %v555 = vld [vmem:[%s5 + $0x3c] sm:$0xf]
        %v556 = vld [vmem:[%s5 + $0x40] sm:$0xf]
        %v557 = vld [vmem:[%s5 + $0x44] sm:$0xf]
        %v558 = vld [vmem:[%s5 + $0x48] sm:$0xf]
        %v559 = vld [vmem:[%s5 + $0x4c] sm:$0xf]
        %v560 = vld [vmem:[%s5 + $0x50] sm:$0xf]
        %v561 = vld [vmem:[%s5 + $0x54] sm:$0xf]
        %v562 = vld [vmem:[%s5 + $0x58] sm:$0xf]
        %v563 = vld [vmem:[%s5 + $0x5c] sm:$0xf]
        %v564 = vld [vmem:[%s5 + $0x60] sm:$0xf]
        %v565 = vld [vmem:[%s5 + $0x64] sm:$0xf]
        %v566 = vld [vmem:[%s5 + $0x68] sm:$0xf]
        %v567 = vld [vmem:[%s5 + $0x6c] sm:$0xf]
        %v568 = vld [vmem:[%s5 + $0x70] sm:$0xf]
        %v569 = vld [vmem:[%s5 + $0x74] sm:$0xf]
        %v570 = vld [vmem:[%s5 + $0x78] sm:$0xf]
        %v571 = vld [vmem:[%s5 + $0x7c] sm:$0xf]
        %v572 = vld [vmem:[%s5 + $0x80] sm:$0xf]
        %v573 = vld [vmem:[%s5 + $0x84] sm:$0xf]
        %v574 = vld [vmem:[%s5 + $0x88] sm:$0xf]
        %v575 = vld [vmem:[%s5 + $0x8c] sm:$0xf]
        %v576 = vld [vmem:[%s5 + $0x90] sm:$0xf]
        %v577 = vld [vmem:[%s5 + $0x94] sm:$0xf]
        %v578 = vld [vmem:[%s5 + $0x98] sm:$0xf]
        %v579 = vld [vmem:[%s5 + $0x9c] sm:$0xf]
        %v580 = vld [vmem:[%s5 + $0xa0] sm:$0xf]
        %v581 = vld [vmem:[%s5 + $0xa4] sm:$0xf]
        %v582 = vld [vmem:[%s5 + $0xa8] sm:$0xf]
        %v583 = vld [vmem:[%s5 + $0xac] sm:$0xf]
        %v584 = vld [vmem:[%s5 + $0xb0] sm:$0xf]
        %v585 = vld [vmem:[%s5 + $0xb4] sm:$0xf]
        %v586 = vld [vmem:[%s5 + $0xb8] sm:$0xf]
        %v587 = vld [vmem:[%s5 + $0xbc] sm:$0xf]
        %v636 = vunpack.c.l.b16 %v540
        %v637 = vunpack.c.l.b16 %v541
        %v638 = vunpack.c.l.b16 %v542
        %v639 = vunpack.c.l.b16 %v543
        %v640 = vunpack.c.l.b16 %v544
        %v641 = vunpack.c.l.b16 %v545
        %v642 = vunpack.c.l.b16 %v546
        %v643 = vunpack.c.l.b16 %v547
        %v644 = vunpack.c.l.b16 %v548
        %v645 = vunpack.c.l.b16 %v549
        %v646 = vunpack.c.l.b16 %v550
        %v647 = vunpack.c.l.b16 %v551
        %v648 = vunpack.c.l.b16 %v552
        %v649 = vunpack.c.l.b16 %v553
        %v650 = vunpack.c.l.b16 %v554
        %v651 = vunpack.c.l.b16 %v555
        %v652 = vunpack.c.l.b16 %v556
        %v653 = vunpack.c.l.b16 %v557
        %v654 = vunpack.c.l.b16 %v558
        %v655 = vunpack.c.l.b16 %v559
        %v656 = vunpack.c.l.b16 %v560
        %v657 = vunpack.c.l.b16 %v561
        %v658 = vunpack.c.l.b16 %v562
        %v659 = vunpack.c.l.b16 %v563
        %v660 = vunpack.c.l.b16 %v564
        %v661 = vunpack.c.l.b16 %v565
        %v662 = vunpack.c.l.b16 %v566
        %v663 = vunpack.c.l.b16 %v567
        %v664 = vunpack.c.l.b16 %v568
        %v665 = vunpack.c.l.b16 %v569
        %v666 = vunpack.c.l.b16 %v570
        %v667 = vunpack.c.l.b16 %v571
        %v668 = vunpack.c.l.b16 %v572
        %v669 = vunpack.c.l.b16 %v573
        %v670 = vunpack.c.l.b16 %v574
        %v671 = vunpack.c.l.b16 %v575
        %v672 = vunpack.c.l.b16 %v576
        %v673 = vunpack.c.l.b16 %v577
        %v674 = vunpack.c.l.b16 %v578
        %v675 = vunpack.c.l.b16 %v579
        %v676 = vunpack.c.l.b16 %v580
        %v677 = vunpack.c.l.b16 %v581
        %v678 = vunpack.c.l.b16 %v582
        %v679 = vunpack.c.l.b16 %v583
        %v680 = vunpack.c.l.b16 %v584
        %v681 = vunpack.c.l.b16 %v585
        %v682 = vunpack.c.l.b16 %v586
        %v683 = vunpack.c.l.b16 %v587
        %v684 = vpack.c.b16 %v637, %v636
        %v685 = vpack.c.b16 %v639, %v638
        %v686 = vpack.c.b16 %v641, %v640
        %v687 = vpack.c.b16 %v643, %v642
        %v688 = vpack.c.b16 %v645, %v644
        %v689 = vpack.c.b16 %v647, %v646
        %v690 = vpack.c.b16 %v649, %v648
        %v691 = vpack.c.b16 %v651, %v650
        %v692 = vpack.c.b16 %v653, %v652
        %v693 = vpack.c.b16 %v655, %v654
        %v694 = vpack.c.b16 %v657, %v656
        %v695 = vpack.c.b16 %v659, %v658
        %v696 = vpack.c.b16 %v661, %v660
        %v697 = vpack.c.b16 %v663, %v662
        %v698 = vpack.c.b16 %v665, %v664
        %v699 = vpack.c.b16 %v667, %v666
        %v700 = vpack.c.b16 %v669, %v668
        %v701 = vpack.c.b16 %v671, %v670
        %v702 = vpack.c.b16 %v673, %v672
        %v703 = vpack.c.b16 %v675, %v674
        %v704 = vpack.c.b16 %v677, %v676
        %v705 = vpack.c.b16 %v679, %v678
        %v706 = vpack.c.b16 %v681, %v680
        %v707 = vpack.c.b16 %v683, %v682
        %732 = vmatprep.subr.bf16.mxu0 0
        %733 = vmatpush1.bf16.msra.mxu0 %v684
        %734 = vmatprep.subr.bf16.mxu0 0
        %735 = vmatpush1.bf16.msra.mxu0 %v685
        %736 = vmatprep.subr.bf16.mxu0 0
        %737 = vmatpush1.bf16.msra.mxu0 %v686
        %738 = vmatprep.subr.bf16.mxu0 0
        %739 = vmatpush1.bf16.msra.mxu0 %v687
        %740 = vmatprep.subr.bf16.mxu0 0
        %741 = vmatpush1.bf16.msra.mxu0 %v688
        %742 = vmatprep.subr.bf16.mxu0 0
        %743 = vmatpush1.bf16.msra.mxu0 %v689
        %744 = vmatprep.subr.bf16.mxu0 0
        %745 = vmatpush1.bf16.msra.mxu0 %v690
        %746 = vmatprep.subr.bf16.mxu0 0
        %747 = vmatpush1.bf16.msra.mxu0 %v691
        %748 = vmatprep.subr.bf16.mxu0 0
        %749 = vmatpush1.bf16.msra.mxu0 %v692
        %750 = vmatprep.subr.bf16.mxu0 0
        %751 = vmatpush1.bf16.msra.mxu0 %v693
        %752 = vmatprep.subr.bf16.mxu0 0
        %753 = vmatpush1.bf16.msra.mxu0 %v694
        %754 = vmatprep.subr.bf16.mxu0 0
        %755 = vmatpush1.bf16.msra.mxu0 %v695
        %756 = vmatprep.subr.bf16.mxu0 0
        %757 = vmatpush1.bf16.msra.mxu0 %v696
        %758 = vmatprep.subr.bf16.mxu0 0
        %759 = vmatpush1.bf16.msra.mxu0 %v697
        %760 = vmatprep.subr.bf16.mxu0 0
        %761 = vmatpush1.bf16.msra.mxu0 %v698
        %762 = vmatprep.subr.bf16.mxu0 0
        %763 = vmatpush1.bf16.msra.mxu0 %v699
        %764 = vmatprep.mubr.bf16.mxu0 %v359
        %765 = vmatmul.mubr.bf16.gmra.mrb[0].mxu0 %v481
        %v766 = vpop.f32.mrb[0].mxu0
        %v767 = vadd.f32 0.0, %v766
        %v768 = vpop.f32.mrb[0].mxu0
        %v769 = vpop.f32.mrb[0].mxu0
        %v770 = vadd.f32 0.0, %v769
        %v771 = vpop.f32.mrb[0].mxu0
        %772 = vmatprep.mubr.bf16.mxu0 %v360
        %773 = vmatmul.mubr.bf16.gmra.mrb[0].mxu0 %v482
        %v774 = vpop.f32.mrb[0].mxu0
        %v775 = vadd.f32 0.0, %v774
        %v776 = vpop.f32.mrb[0].mxu0
        %v777 = vpop.f32.mrb[0].mxu0
        %v778 = vadd.f32 0.0, %v777
        %v779 = vpop.f32.mrb[0].mxu0
        %780 = vdwg.mxu0
        %781 = vmatprep.subr.bf16.mxu0 0
        %782 = vmatpush1.bf16.msra.mxu0 %v700
        %783 = vmatprep.subr.bf16.mxu0 0
        %784 = vmatpush1.bf16.msra.mxu0 %v701
        %785 = vmatprep.subr.bf16.mxu0 0
        %786 = vmatpush1.bf16.msra.mxu0 %v702
        %787 = vmatprep.subr.bf16.mxu0 0
        %788 = vmatpush1.bf16.msra.mxu0 %v703
        %789 = vmatprep.subr.bf16.mxu0 0
        %790 = vmatpush1.bf16.msra.mxu0 %v704
        %791 = vmatprep.subr.bf16.mxu0 0
        %792 = vmatpush1.bf16.msra.mxu0 %v705
        %793 = vmatprep.subr.bf16.mxu0 0
        %794 = vmatpush1.bf16.msra.mxu0 %v706
        %795 = vmatprep.subr.bf16.mxu0 0
        %796 = vmatpush1.bf16.msra.mxu0 %v707
        %797 = vmatprep.subr.bf16.mxu0 0
        %798 = vmatpush1.bf16.msra.mxu0 0
        %799 = vmatprep.subr.bf16.mxu0 0
        %800 = vmatpush1.bf16.msra.mxu0 0
        %801 = vmatprep.subr.bf16.mxu0 0
        %802 = vmatpush1.bf16.msra.mxu0 0
        %803 = vmatprep.subr.bf16.mxu0 0
        %804 = vmatpush1.bf16.msra.mxu0 0
        %805 = vmatprep.subr.bf16.mxu0 0
        %806 = vmatpush1.bf16.msra.mxu0 0
        %807 = vmatprep.subr.bf16.mxu0 0
        %808 = vmatpush1.bf16.msra.mxu0 0
        %809 = vmatprep.subr.bf16.mxu0 0
        %810 = vmatpush1.bf16.msra.mxu0 0
        %811 = vmatprep.subr.bf16.mxu0 0
        %812 = vmatpush1.bf16.msra.mxu0 0
        %813 = vmatprep.mubr.bf16.mxu0 0
        %814 = vmatmul.mubr.bf16.gmra.mrb[0].mxu0 %v538
        %v815 = vpop.f32.mrb[0].mxu0
        %v816 = vadd.f32 %v767, %v815
        %v817 = vpop.f32.mrb[0].mxu0
        %v818 = vpop.f32.mrb[0].mxu0
        %v819 = vadd.f32 %v770, %v818
        %v820 = vpop.f32.mrb[0].mxu0
        %821 = vmatprep.mubr.bf16.mxu0 0
        %822 = vmatmul.mubr.bf16.gmra.mrb[0].mxu0 %v539
        %v823 = vpop.f32.mrb[0].mxu0
        %v824 = vadd.f32 %v775, %v823
        %v825 = vpop.f32.mrb[0].mxu0
        %v826 = vpop.f32.mrb[0].mxu0
        %v827 = vadd.f32 %v778, %v826
        %v828 = vpop.f32.mrb[0].mxu0
        %829 = vdwg.mxu0
        %v830 = vld [vmem:[%s320] sm:$0x1]
        %v832 = vlaneseq
        %v833 = vshrl.u32 %v832, 7
        %v834 = vsub.s32 0, %v833
        %v835 = vrot.slane %v830, %v834
        %v837 = vadd.f32 %v816, %v835
        %v838 = vadd.f32 %v819, %v835
        %v839 = vsub.f32 %v837, %v335
        %v840 = vsub.f32 %v838, %v336
        %v841 = vmul.f32 %v839, %v839
        %v842 = vmul.f32 %v840, %v840
        %v843 = vadd.f32 %v841, 0.0
        %v844 = vadd.f32 %v843, %v842
        %s845 = scalar_lea.vmem %s320, 1
        %v846 = vld [vmem:[%s845] sm:$0x1]
        %v848 = vlaneseq
        %v849 = vshrl.u32 %v848, 7
        %v850 = vsub.s32 0, %v849
        %v851 = vrot.slane %v846, %v850
        %v853 = vadd.f32 %v824, %v851
        %v854 = vadd.f32 %v827, %v851
        %v855 = vsub.f32 %v853, %v352
        %v856 = vsub.f32 %v854, %v353
        %v857 = vmul.f32 %v855, %v855
        %v858 = vmul.f32 %v856, %v856
        %v859 = vadd.f32 %v844, %v857
        %v860 = vadd.f32 %v859, %v858
        %861 = vst [vmem:[%s325] sm:$0xff] %v860
        %p862 = scmp.lt.s32.totalorder %s19, 1
        %s863 = scalar_select %p862, %s19, 1
        %s864 = smul.addr %s863, 8
        %s865 = scalar_lea.vmem %s6, %s864
        // Predicated region
        $region53: #{gaussian_diffusion_p_losses.1} parent=43 // pred_check
          %p866 = pneg %p178
        $region54: #{gaussian_diffusion_p_losses.1} parent=43 // pred_check_branch
          %868 = sbr.rel (%p866) target = $region56
        $region55: #{gaussian_diffusion_p_losses.1} parent=43 // pred_region
          _
        $region56: #{gaussian_diffusion_p_losses.1} parent=43 // pred_fallthru
          _
      $region44: #{gaussian_diffusion_p_losses.1} parent=5 // pred_fallthru
        _
      %p869 = scmp.le.s32.totalorder 2, %s14
      // Predicated region
      $region57: #{gaussian_diffusion_p_losses.1} parent=5 // pred_check
        %p870 = pneg %p869
      $region58: #{gaussian_diffusion_p_losses.1} parent=5 // pred_check_branch
        %872 = sbr.rel (%p870) target = $region60
      $region59: #{gaussian_diffusion_p_losses.1} parent=5 // pred_region
        %s873 = ssub.s32 %s14, 2
        // Predicated region
        $region61: #{gaussian_diffusion_p_losses.1} parent=59 // pred_check
          %p874 = pneg %p184
        $region62: #{gaussian_diffusion_p_losses.1} parent=59 // pred_check_branch
          %876 = sbr.rel (%p874) target = $region64
        $region63: #{gaussian_diffusion_p_losses.1} parent=59 // pred_region
          %p877 = scmp.lt.s32.totalorder %s20, 1
          %s878 = scalar_select %p877, %s20, 1
          %s879 = smul.addr %s878, 8
          %s880 = scalar_lea.vmem %s6, %s879
        $region64: #{gaussian_diffusion_p_losses.1} parent=59 // pred_fallthru
          _
      $region60: #{gaussian_diffusion_p_losses.1} parent=5 // pred_fallthru
        _
    $region6: #{gaussian_diffusion_p_losses.1} parent=1 // loop_footer
      %s18 = sadd.s32 1, %s14
    $region7: #{gaussian_diffusion_p_losses.1} parent=1 // loop_footer_branch
      %13 = sbr.rel target = $region3
    $region8: #{gaussian_diffusion_p_losses.1} parent=1 // loop_exit
      _
    %881 = vsyncpa [#allocation3], 1
    %s882 = scalar_lea.sflag [#allocation3], 1
    %883 = vsyncpa %s882, 1
    %884 = vsyncpa [#allocation5], 1

</llo_original>
